<compile_context>
chip_gen: v7x
topology: tpu7x:2x2x1
jax: 0.10.0
libtpu: 0.0.40
codegen_flags: <defaults>
</compile_context>

<pallas_src>
import jax
import jax.numpy as jnp
from jax.experimental import pallas as pl
from jax.experimental.pallas import tpu as pltpu


def critic_kernel(x_ref, w1_ref, b1_ref, w2_ref, b2_ref,
                  w3_ref, b3_ref, w4_ref, b4_ref, o_ref):
    # x_ref: (obs, bb)  -- feature-major, batch on lanes
    # wi_ref: (out, in) (PyTorch layout), bi_ref: (out, 1)
    # w4_ref: (hidden, 1), b4_ref: (1, 1), o_ref: (1, bb)
    x = x_ref[...]

    # Layer 1: Linear + tanh  (MXU matmul, f32 accumulation; tanh in f32)
    w1 = w1_ref[...]
    h = jnp.tanh(jnp.dot(w1, x, preferred_element_type=jnp.float32)
                 + b1_ref[...])                      # (hidden, bb) f32

    # Layer 2
    w2 = w2_ref[...]
    h = jnp.tanh(jnp.dot(w2, h.astype(w2.dtype),
                         preferred_element_type=jnp.float32)
                 + b2_ref[...])

    # Layer 3
    w3 = w3_ref[...]
    h = jnp.tanh(jnp.dot(w3, h.astype(w3.dtype),
                         preferred_element_type=jnp.float32)
                 + b3_ref[...])

    # Layer 4: hidden -> 1.  Row-reduction over the sublane (feature) axis keeps
    # the result lane-dense (1, bb) and avoids an N=1 MXU pass.
    val = jnp.sum(h * w4_ref[...], axis=0, keepdims=True) + b4_ref[...]
    o_ref[...] = val.astype(o_ref.dtype)


def critic_forward(x, params, *, block_batch=512, use_bf16=True):
    """x: [B, obs] float32 -> [B, 1] float32.

    params are in PyTorch layout: each layer is (W[out, in], b[out]).
    """
    (w1, b1), (w2, b2), (w3, b3), (w4, b4) = params
    B, obs = x.shape
    hidden = w1.shape[0]

    # Pick the batch tile:
    #  - large batches: block_batch rows (multiple of 128 -> full MXU passes,
    #    lane-dense output blocks, and enough grid steps to shard across v7x's
    #    two TensorCores)
    #  - small batches: one tile = padded batch (multiple of 8)
    if B >= block_batch:
        bb = block_batch
    else:
        bb = max(8, ((B + 7) // 8) * 8)
    padded_B = ((B + bb - 1) // bb) * bb
    grid = (padded_B // bb,)

    mat_dtype = jnp.bfloat16 if use_bf16 else jnp.float32

    # Feature-major input tile, padded along batch if needed.
    xt = x.T.astype(mat_dtype)                       # (obs, B)
    if padded_B != B:
        xt = jnp.pad(xt, ((0, 0), (0, padded_B - B)))

    # Weights for the 3 MXU layers as bf16 operands; biases + last layer in f32.
    w1m = w1.astype(mat_dtype)
    w2m = w2.astype(mat_dtype)
    w3m = w3.astype(mat_dtype)
    b1c = b1.reshape(hidden, 1).astype(jnp.float32)
    b2c = b2.reshape(hidden, 1).astype(jnp.float32)
    b3c = b3.reshape(hidden, 1).astype(jnp.float32)
    w4c = w4.reshape(hidden, 1).astype(jnp.float32)
    b4c = b4.reshape(1, 1).astype(jnp.float32)

    def full(arr):
        # whole-array block, resident across all grid steps
        return pl.BlockSpec(arr.shape, lambda i: tuple(0 for _ in arr.shape))

    out = pl.pallas_call(
        critic_kernel,
        out_shape=jax.ShapeDtypeStruct((1, padded_B), jnp.float32),
        grid=grid,
        in_specs=[
            pl.BlockSpec((obs, bb), lambda i: (0, i)),   # x tile (batch on lanes)
            full(w1m), full(b1c),
            full(w2m), full(b2c),
            full(w3m), full(b3c),
            full(w4c), full(b4c),
        ],
        out_specs=pl.BlockSpec((1, bb), lambda i: (0, i)),  # lane-dense output
        compiler_params=pltpu.CompilerParams(
            dimension_semantics=("parallel",),
            # Intermediates are tiny (bb*hidden*4B); only raise vmem_limit_bytes
            # if block_batch is pushed past ~2048.
        ),
    )(xt, w1m, b1c, w2m, b2c, w3m, b3c, w4c, b4c)

    return out[:, :B].T                               # (B, 1) float32


def init_params(key, obs_size, hidden_size=64):
    """Deterministic init mimicking nn.Linear's U(-1/sqrt(fan_in), +1/sqrt(fan_in)).

    Returns PyTorch-layout params: W[out, in], b[out].
    """
    def linear(k, fan_in, fan_out):
        kw, kb = jax.random.split(k)
        bound = 1.0 / jnp.sqrt(fan_in)
        w = jax.random.uniform(kw, (fan_out, fan_in), jnp.float32, -bound, bound)
        b = jax.random.uniform(kb, (fan_out,), jnp.float32, -bound, bound)
        return w, b

    k1, k2, k3, k4 = jax.random.split(key, 4)
    return (
        linear(k1, obs_size, hidden_size),
        linear(k2, hidden_size, hidden_size),
        linear(k3, hidden_size, hidden_size),
        linear(k4, hidden_size, 1),
    )


def reference_forward(x, params):
    (w1, b1), (w2, b2), (w3, b3), (w4, b4) = params
    h = jnp.tanh(x @ w1.T + b1)
    h = jnp.tanh(h @ w2.T + b2)
    h = jnp.tanh(h @ w3.T + b3)
    return h @ w4.T + b4


if __name__ == "__main__":
    key = jax.random.PRNGKey(0)
    k_x, k_p = jax.random.split(key)

    batch, obs_size, hidden = 6, 16, 64
    x = jax.random.normal(k_x, (batch, obs_size), jnp.float32)
    params = init_params(k_p, obs_size, hidden)

    out = jax.block_until_ready(critic_forward(x, params))
    ref = reference_forward(x, params)

    assert out.shape == (batch, 1)
    # bf16 matmul operands (f32 accumulation) -> loosened tolerance vs f32 ref.
    assert jnp.allclose(out, ref, atol=3e-2, rtol=3e-2), (out, ref)

    print("KERNEL_OK")
</pallas_src>

<mosaic_0001>
module attributes {stable_mosaic.version = 11 : i64} {
  func.func @critic_kernel(%arg0: i32, %arg1: memref<16x8xbf16, #tpu.memory_space<vmem>>, %arg2: memref<64x16xbf16, #tpu.memory_space<vmem>>, %arg3: memref<64x1xf32, #tpu.memory_space<vmem>>, %arg4: memref<64x64xbf16, #tpu.memory_space<vmem>>, %arg5: memref<64x1xf32, #tpu.memory_space<vmem>>, %arg6: memref<64x64xbf16, #tpu.memory_space<vmem>>, %arg7: memref<64x1xf32, #tpu.memory_space<vmem>>, %arg8: memref<64x1xf32, #tpu.memory_space<vmem>>, %arg9: memref<1x1xf32, #tpu.memory_space<vmem>>, %arg10: memref<1x8xf32, #tpu.memory_space<vmem>>) attributes {dimension_semantics = [#tpu.dimension_semantics<parallel>], iteration_bounds = array<i64: 1>, scalar_prefetch = 0 : i64, scratch_operands = 0 : i64, tpu.core_type = #tpu.core_type<tc>, window_params = [{transform_indices = @transform_0, window_bounds = array<i64: 16, 8>}, {pipeline_mode = #tpu.pipeline_mode<synchronous>, transform_indices = @transform_1, window_bounds = array<i64: 64, 16>}, {pipeline_mode = #tpu.pipeline_mode<synchronous>, transform_indices = @transform_2, window_bounds = array<i64: 64, 1>}, {pipeline_mode = #tpu.pipeline_mode<synchronous>, transform_indices = @transform_3, window_bounds = array<i64: 64, 64>}, {pipeline_mode = #tpu.pipeline_mode<synchronous>, transform_indices = @transform_4, window_bounds = array<i64: 64, 1>}, {pipeline_mode = #tpu.pipeline_mode<synchronous>, transform_indices = @transform_5, window_bounds = array<i64: 64, 64>}, {pipeline_mode = #tpu.pipeline_mode<synchronous>, transform_indices = @transform_6, window_bounds = array<i64: 64, 1>}, {pipeline_mode = #tpu.pipeline_mode<synchronous>, transform_indices = @transform_7, window_bounds = array<i64: 64, 1>}, {pipeline_mode = #tpu.pipeline_mode<synchronous>, transform_indices = @transform_8, window_bounds = array<i64: 1, 1>}, {transform_indices = @transform_9, window_bounds = array<i64: 1, 8>}]} {
    %c0 = arith.constant 0 : index
    %c0_0 = arith.constant 0 : index
    %0 = vector.load %arg1[%c0, %c0_0] : memref<16x8xbf16, #tpu.memory_space<vmem>>, vector<16x8xbf16>
    %c0_1 = arith.constant 0 : index
    %c0_2 = arith.constant 0 : index
    %1 = vector.load %arg2[%c0_1, %c0_2] : memref<64x16xbf16, #tpu.memory_space<vmem>>, vector<64x16xbf16>
    %cst = arith.constant dense<0.000000e+00> : vector<64x8xf32>
    %2 = tpu.matmul %1, %0, %cst {dimension_numbers = #tpu.dot_dimension_numbers<[1], [0], [0], [1], [0, 0, 1, 1], [], []>} : vector<64x16xbf16>, vector<16x8xbf16>, vector<64x8xf32> -> vector<64x8xf32>
    %c0_3 = arith.constant 0 : index
    %c0_4 = arith.constant 0 : index
    %3 = vector.load %arg3[%c0_3, %c0_4] : memref<64x1xf32, #tpu.memory_space<vmem>>, vector<64x1xf32>
    %4 = vector.broadcast %3 : vector<64x1xf32> to vector<64x8xf32>
    %5 = arith.addf %2, %4 : vector<64x8xf32>
    %6 = math.tanh %5 : vector<64x8xf32>
    %c0_5 = arith.constant 0 : index
    %c0_6 = arith.constant 0 : index
    %7 = vector.load %arg4[%c0_5, %c0_6] : memref<64x64xbf16, #tpu.memory_space<vmem>>, vector<64x64xbf16>
    %8 = arith.truncf %6 : vector<64x8xf32> to vector<64x8xbf16>
    %cst_7 = arith.constant dense<0.000000e+00> : vector<64x8xf32>
    %9 = tpu.matmul %7, %8, %cst_7 {dimension_numbers = #tpu.dot_dimension_numbers<[1], [0], [0], [1], [0, 0, 1, 1], [], []>} : vector<64x64xbf16>, vector<64x8xbf16>, vector<64x8xf32> -> vector<64x8xf32>
    %c0_8 = arith.constant 0 : index
    %c0_9 = arith.constant 0 : index
    %10 = vector.load %arg5[%c0_8, %c0_9] : memref<64x1xf32, #tpu.memory_space<vmem>>, vector<64x1xf32>
    %11 = vector.broadcast %10 : vector<64x1xf32> to vector<64x8xf32>
    %12 = arith.addf %9, %11 : vector<64x8xf32>
    %13 = math.tanh %12 : vector<64x8xf32>
    %c0_10 = arith.constant 0 : index
    %c0_11 = arith.constant 0 : index
    %14 = vector.load %arg6[%c0_10, %c0_11] : memref<64x64xbf16, #tpu.memory_space<vmem>>, vector<64x64xbf16>
    %15 = arith.truncf %13 : vector<64x8xf32> to vector<64x8xbf16>
    %cst_12 = arith.constant dense<0.000000e+00> : vector<64x8xf32>
    %16 = tpu.matmul %14, %15, %cst_12 {dimension_numbers = #tpu.dot_dimension_numbers<[1], [0], [0], [1], [0, 0, 1, 1], [], []>} : vector<64x64xbf16>, vector<64x8xbf16>, vector<64x8xf32> -> vector<64x8xf32>
    %c0_13 = arith.constant 0 : index
    %c0_14 = arith.constant 0 : index
    %17 = vector.load %arg7[%c0_13, %c0_14] : memref<64x1xf32, #tpu.memory_space<vmem>>, vector<64x1xf32>
    %18 = vector.broadcast %17 : vector<64x1xf32> to vector<64x8xf32>
    %19 = arith.addf %16, %18 : vector<64x8xf32>
    %20 = math.tanh %19 : vector<64x8xf32>
    %c0_15 = arith.constant 0 : index
    %c0_16 = arith.constant 0 : index
    %21 = vector.load %arg8[%c0_15, %c0_16] : memref<64x1xf32, #tpu.memory_space<vmem>>, vector<64x1xf32>
    %22 = vector.broadcast %21 : vector<64x1xf32> to vector<64x8xf32>
    %23 = arith.mulf %20, %22 : vector<64x8xf32>
    %cst_17 = arith.constant dense<0.000000e+00> : vector<8xf32>
    %24 = vector.multi_reduction <add>, %23, %cst_17 [0] : vector<64x8xf32> to vector<8xf32>
    %25 = vector.shape_cast %24 : vector<8xf32> to vector<1x8xf32>
    %c0_18 = arith.constant 0 : index
    %c0_19 = arith.constant 0 : index
    %26 = vector.load %arg9[%c0_18, %c0_19] : memref<1x1xf32, #tpu.memory_space<vmem>>, vector<1x1xf32>
    %27 = vector.broadcast %26 : vector<1x1xf32> to vector<1x8xf32>
    %28 = arith.addf %25, %27 : vector<1x8xf32>
    %c0_20 = arith.constant 0 : index
    %c0_21 = arith.constant 0 : index
    %29 = vector.load %arg10[%c0_20, %c0_21] : memref<1x8xf32, #tpu.memory_space<vmem>>, vector<1x8xf32>
    tpu.vector_store %arg10[%c0_20, %c0_21], %28 {strides = array<i32>} : memref<1x8xf32, #tpu.memory_space<vmem>>, vector<1x8xf32>,
    return
  }
  func.func @transform_0(%arg0: i32) -> (i32, i32) {
    %c0_i32 = arith.constant 0 : i32
    %c0_i32_0 = arith.constant 0 : i32
    return %c0_i32, %arg0 : i32, i32
  }
  func.func @transform_1(%arg0: i32) -> (i32, i32) {
    %c0_i32 = arith.constant 0 : i32
    %c0_i32_0 = arith.constant 0 : i32
    %c0_i32_1 = arith.constant 0 : i32
    return %c0_i32, %c0_i32_0 : i32, i32
  }
  func.func @transform_2(%arg0: i32) -> (i32, i32) {
    %c0_i32 = arith.constant 0 : i32
    %c0_i32_0 = arith.constant 0 : i32
    %c0_i32_1 = arith.constant 0 : i32
    return %c0_i32, %c0_i32_0 : i32, i32
  }
  func.func @transform_3(%arg0: i32) -> (i32, i32) {
    %c0_i32 = arith.constant 0 : i32
    %c0_i32_0 = arith.constant 0 : i32
    %c0_i32_1 = arith.constant 0 : i32
    return %c0_i32, %c0_i32_0 : i32, i32
  }
  func.func @transform_4(%arg0: i32) -> (i32, i32) {
    %c0_i32 = arith.constant 0 : i32
    %c0_i32_0 = arith.constant 0 : i32
    %c0_i32_1 = arith.constant 0 : i32
    return %c0_i32, %c0_i32_0 : i32, i32
  }
  func.func @transform_5(%arg0: i32) -> (i32, i32) {
    %c0_i32 = arith.constant 0 : i32
    %c0_i32_0 = arith.constant 0 : i32
    %c0_i32_1 = arith.constant 0 : i32
    return %c0_i32, %c0_i32_0 : i32, i32
  }
  func.func @transform_6(%arg0: i32) -> (i32, i32) {
    %c0_i32 = arith.constant 0 : i32
    %c0_i32_0 = arith.constant 0 : i32
    %c0_i32_1 = arith.constant 0 : i32
    return %c0_i32, %c0_i32_0 : i32, i32
  }
  func.func @transform_7(%arg0: i32) -> (i32, i32) {
    %c0_i32 = arith.constant 0 : i32
    %c0_i32_0 = arith.constant 0 : i32
    %c0_i32_1 = arith.constant 0 : i32
    return %c0_i32, %c0_i32_0 : i32, i32
  }
  func.func @transform_8(%arg0: i32) -> (i32, i32) {
    %c0_i32 = arith.constant 0 : i32
    %c0_i32_0 = arith.constant 0 : i32
    %c0_i32_1 = arith.constant 0 : i32
    return %c0_i32, %c0_i32_0 : i32, i32
  }
  func.func @transform_9(%arg0: i32) -> (i32, i32) {
    %c0_i32 = arith.constant 0 : i32
    %c0_i32_0 = arith.constant 0 : i32
    return %c0_i32, %arg0 : i32, i32
  }
}

</mosaic_0001>

<llo_original>
// kernel: tpu_custom_call.1
$region0: #{tpu_custom_call.1}
  #allocation0 [shape = 'u32[]', space=smem, size = 0x4, offset = 0x4, fixed_abs, tag = 'smem constant byte address 0x4 - core index']
  #allocation1 [shape = 'u32[144,128]{1,0:T(1,128)}', space=vmem, size = 0x12000, scoped, tag = 'internal scratch']
  #allocation2 [shape = 'f32[1,1]{1,0:T(1,128)S(1)}', space=vmem, size = 0x200, scoped, tag = 'scoped memory for tpu_custom_call.1']
  %s0 = inlined_call_operand.vmem [shape: bf16[16,8], index: 0, kind: input, shape index: {}]
  %s1 = inlined_call_operand.vmem [shape: bf16[64,16], index: 1, kind: input, shape index: {}]
  %s2 = inlined_call_operand.vmem [shape: f32[64,1], index: 2, kind: input, shape index: {}]
  %s3 = inlined_call_operand.vmem [shape: bf16[64,64], index: 3, kind: input, shape index: {}]
  %s4 = inlined_call_operand.vmem [shape: f32[64,1], index: 4, kind: input, shape index: {}]
  %s5 = inlined_call_operand.vmem [shape: bf16[64,64], index: 5, kind: input, shape index: {}]
  %s6 = inlined_call_operand.vmem [shape: f32[64,1], index: 6, kind: input, shape index: {}]
  %s7 = inlined_call_operand.vmem [shape: f32[64,1], index: 7, kind: input, shape index: {}]
  %s8 = inlined_call_operand.<no memory space> [shape: f32[1,1], index: 8, kind: input, shape index: {}]
  %s9 = inlined_call_operand.hbm [shape: f32[1,8], index: 9, kind: output, shape index: {}]
  %s10 = sld [smem:[#allocation0]]
  $region46: #{tpu_custom_call.1} parent=0
    _
  %s12 = ssub.s32 1, %s10
  %s13 = scalar_select 0, %s12, %s10
  %v14 = vstv %s8
  %15 = vst [vmem:[#allocation2] sm:$0x1] %v14
  $region1: #{tpu_custom_call.1} parent=0
    #allocation3 [shape = 'u8[512]{0}', space=vmem, size = 0x400, scoped, tag = 'output window, operand 0, single buffered']
    #allocation4 [shape = 's32[1]{0}', space=sflag, size = 0x4, scoped, tag = 'scoped memory for tpu_custom_call.1']
    %16 = vsyncpa [#allocation4], 0
    // Predicated region
    $region2: #{tpu_custom_call.1} parent=1 // pred_check
      _
    $region3: #{tpu_custom_call.1} parent=1 // pred_check_branch
      %18 = sbr.rel (0) target = $region5
    $region4: #{tpu_custom_call.1} parent=1 // pred_region
      _
    $region5: #{tpu_custom_call.1} parent=1 // pred_fallthru
      _
    // Predicated region
    $region6: #{tpu_custom_call.1} parent=1 // pred_check
      _
    $region7: #{tpu_custom_call.1} parent=1 // pred_check_branch
      %20 = sbr.rel (0) target = $region9
    $region8: #{tpu_custom_call.1} parent=1 // pred_region
      _
    $region9: #{tpu_custom_call.1} parent=1 // pred_fallthru
      _
    // Predicated region
    $region10: #{tpu_custom_call.1} parent=1 // pred_check
      _
    $region11: #{tpu_custom_call.1} parent=1 // pred_check_branch
      %22 = sbr.rel (0) target = $region13
    $region12: #{tpu_custom_call.1} parent=1 // pred_region
      _
    $region13: #{tpu_custom_call.1} parent=1 // pred_fallthru
      _
    // Predicated region
    $region14: #{tpu_custom_call.1} parent=1 // pred_check
      _
    $region15: #{tpu_custom_call.1} parent=1 // pred_check_branch
      %24 = sbr.rel (0) target = $region17
    $region16: #{tpu_custom_call.1} parent=1 // pred_region
      _
    $region17: #{tpu_custom_call.1} parent=1 // pred_fallthru
      _
    // Predicated region
    $region18: #{tpu_custom_call.1} parent=1 // pred_check
      _
    $region19: #{tpu_custom_call.1} parent=1 // pred_check_branch
      %26 = sbr.rel (0) target = $region21
    $region20: #{tpu_custom_call.1} parent=1 // pred_region
      _
    $region21: #{tpu_custom_call.1} parent=1 // pred_fallthru
      _
    // Predicated region
    $region22: #{tpu_custom_call.1} parent=1 // pred_check
      _
    $region23: #{tpu_custom_call.1} parent=1 // pred_check_branch
      %28 = sbr.rel (0) target = $region25
    $region24: #{tpu_custom_call.1} parent=1 // pred_region
      _
    $region25: #{tpu_custom_call.1} parent=1 // pred_fallthru
      _
    // Predicated region
    $region26: #{tpu_custom_call.1} parent=1 // pred_check
      _
    $region27: #{tpu_custom_call.1} parent=1 // pred_check_branch
      %30 = sbr.rel (0) target = $region29
    $region28: #{tpu_custom_call.1} parent=1 // pred_region
      _
    $region29: #{tpu_custom_call.1} parent=1 // pred_fallthru
      _
    // Predicated region
    $region30: #{tpu_custom_call.1} parent=1 // pred_check
      _
    $region31: #{tpu_custom_call.1} parent=1 // pred_check_branch
      %32 = sbr.rel (0) target = $region33
    $region32: #{tpu_custom_call.1} parent=1 // pred_region
      _
    $region33: #{tpu_custom_call.1} parent=1 // pred_fallthru
      _
    // Predicated region
    $region34: #{tpu_custom_call.1} parent=1 // pred_check
      _
    $region35: #{tpu_custom_call.1} parent=1 // pred_check_branch
      %34 = sbr.rel (0) target = $region37
    $region36: #{tpu_custom_call.1} parent=1 // pred_region
      _
    $region37: #{tpu_custom_call.1} parent=1 // pred_fallthru
      _
    %v36 = vld [vmem:[%s0] sm:$0xf]
    %v37 = vld [vmem:[%s0 + $0x4] sm:$0xf]
    %v38 = vld [vmem:[%s1] sm:$0xf]
    %v39 = vld [vmem:[%s1 + $0x4] sm:$0xf]
    %v40 = vld [vmem:[%s1 + $0x8] sm:$0xf]
    %v41 = vld [vmem:[%s1 + $0xc] sm:$0xf]
    %v42 = vld [vmem:[%s1 + $0x10] sm:$0xf]
    %v43 = vld [vmem:[%s1 + $0x14] sm:$0xf]
    %v44 = vld [vmem:[%s1 + $0x18] sm:$0xf]
    %v45 = vld [vmem:[%s1 + $0x1c] sm:$0xf]
    %v46 = vld [vmem:[%s2] sm:$0xff]
    %v47 = vld [vmem:[%s2 + $0x8] sm:$0xff]
    %v48 = vld [vmem:[%s2 + $0x10] sm:$0xff]
    %v49 = vld [vmem:[%s2 + $0x18] sm:$0xff]
    %v50 = vld [vmem:[%s2 + $0x20] sm:$0xff]
    %v51 = vld [vmem:[%s2 + $0x28] sm:$0xff]
    %v52 = vld [vmem:[%s2 + $0x30] sm:$0xff]
    %v53 = vld [vmem:[%s2 + $0x38] sm:$0xff]
    %55 = vset.pattern.permute.xlu0 0
    %56 = vperm.xlu0 %55, %v46
    %v57 = vpop.permute.xlu0 %56
    %60 = vset.pattern.permute.xlu0 0
    %61 = vperm.xlu0 %60, %v47
    %v62 = vpop.permute.xlu0 %61
    %65 = vset.pattern.permute.xlu0 0
    %66 = vperm.xlu0 %65, %v48
    %v67 = vpop.permute.xlu0 %66
    %70 = vset.pattern.permute.xlu0 0
    %71 = vperm.xlu0 %70, %v49
    %v72 = vpop.permute.xlu0 %71
    %75 = vset.pattern.permute.xlu0 0
    %76 = vperm.xlu0 %75, %v50
    %v77 = vpop.permute.xlu0 %76
    %80 = vset.pattern.permute.xlu0 0
    %81 = vperm.xlu0 %80, %v51
    %v82 = vpop.permute.xlu0 %81
    %85 = vset.pattern.permute.xlu0 0
    %86 = vperm.xlu0 %85, %v52
    %v87 = vpop.permute.xlu0 %86
    %90 = vset.pattern.permute.xlu0 0
    %91 = vperm.xlu0 %90, %v53
    %v92 = vpop.permute.xlu0 %91
    %v102 = vunpack.c.l.b16 %v38
    %v103 = vunpack.c.l.b16 %v39
    %v104 = vunpack.c.l.b16 %v40
    %v105 = vunpack.c.l.b16 %v41
    %v106 = vunpack.c.l.b16 %v42
    %v107 = vunpack.c.l.b16 %v43
    %v108 = vunpack.c.l.b16 %v44
    %v109 = vunpack.c.l.b16 %v45
    %v110 = vpack.c.b16 %v103, %v102
    %v111 = vpack.c.b16 %v105, %v104
    %v112 = vpack.c.b16 %v107, %v106
    %v113 = vpack.c.b16 %v109, %v108
    %v116 = vunpack.c.l.b16 %v36
    %v117 = vunpack.c.l.b16 %v37
    %v118 = vpack.c.b16 %v117, %v116
    %vm120 = vcmask 130048
    %v122 = vsel %vm120, %v110, 0
    %v125 = vsel %vm120, %v111, 0
    %v128 = vsel %vm120, %v112, 0
    %v131 = vsel %vm120, %v113, 0
    %133 = vmatprep.subr.bf16.mxu0 0
    %134 = vmatpush1.bf16.msra.mxu0 %v118
    %135 = vmatprep.subr.bf16.mxu0 0
    %136 = vmatpush1.bf16.msra.mxu0 0
    %137 = vmatprep.subr.bf16.mxu0 0
    %138 = vmatpush1.bf16.msra.mxu0 0
    %139 = vmatprep.subr.bf16.mxu0 0
    %140 = vmatpush1.bf16.msra.mxu0 0
    %141 = vmatprep.subr.bf16.mxu0 0
    %142 = vmatpush1.bf16.msra.mxu0 0
    %143 = vmatprep.subr.bf16.mxu0 0
    %144 = vmatpush1.bf16.msra.mxu0 0
    %145 = vmatprep.subr.bf16.mxu0 0
    %146 = vmatpush1.bf16.msra.mxu0 0
    %147 = vmatprep.subr.bf16.mxu0 0
    %148 = vmatpush1.bf16.msra.mxu0 0
    %149 = vmatprep.subr.bf16.mxu0 0
    %150 = vmatpush1.bf16.msra.mxu0 0
    %151 = vmatprep.subr.bf16.mxu0 0
    %152 = vmatpush1.bf16.msra.mxu0 0
    %153 = vmatprep.subr.bf16.mxu0 0
    %154 = vmatpush1.bf16.msra.mxu0 0
    %155 = vmatprep.subr.bf16.mxu0 0
    %156 = vmatpush1.bf16.msra.mxu0 0
    %157 = vmatprep.subr.bf16.mxu0 0
    %158 = vmatpush1.bf16.msra.mxu0 0
    %159 = vmatprep.subr.bf16.mxu0 0
    %160 = vmatpush1.bf16.msra.mxu0 0
    %161 = vmatprep.subr.bf16.mxu0 0
    %162 = vmatpush1.bf16.msra.mxu0 0
    %163 = vmatprep.subr.bf16.mxu0 0
    %164 = vmatpush1.bf16.msra.mxu0 0
    %165 = vmatprep.mubr.bf16.mxu0 0
    %166 = vmatmul.mubr.bf16.gmra.mrb[0].mxu0 %v122
    %v167 = vpop.f32.mrb[0].mxu0
    %v168 = vadd.f32 %v57, %v167
    %v169 = vpop.f32.mrb[0].mxu0
    %v170 = vpop.f32.mrb[0].mxu0
    %v171 = vadd.f32 %v62, %v170
    %v172 = vpop.f32.mrb[0].mxu0
    %173 = vmatprep.mubr.bf16.mxu0 0
    %174 = vmatmul.mubr.bf16.gmra.mrb[0].mxu0 %v125
    %v175 = vpop.f32.mrb[0].mxu0
    %v176 = vadd.f32 %v67, %v175
    %v177 = vpop.f32.mrb[0].mxu0
    %v178 = vpop.f32.mrb[0].mxu0
    %v179 = vadd.f32 %v72, %v178
    %v180 = vpop.f32.mrb[0].mxu0
    %181 = vmatprep.mubr.bf16.mxu0 0
    %182 = vmatmul.mubr.bf16.gmra.mrb[0].mxu0 %v128
    %v183 = vpop.f32.mrb[0].mxu0
    %v184 = vadd.f32 %v77, %v183
    %v185 = vpop.f32.mrb[0].mxu0
    %v186 = vpop.f32.mrb[0].mxu0
    %v187 = vadd.f32 %v82, %v186
    %v188 = vpop.f32.mrb[0].mxu0
    %189 = vmatprep.mubr.bf16.mxu0 0
    %190 = vmatmul.mubr.bf16.gmra.mrb[0].mxu0 %v131
    %v191 = vpop.f32.mrb[0].mxu0
    %v192 = vadd.f32 %v87, %v191
    %v193 = vpop.f32.mrb[0].mxu0
    %v194 = vpop.f32.mrb[0].mxu0
    %v195 = vadd.f32 %v92, %v194
    %v196 = vpop.f32.mrb[0].mxu0
    %197 = vdwg.mxu0
    %v198 = vtanh.pop %v168
    %v199 = vtanh.pop %v171
    %v200 = vtanh.pop %v176
    %v201 = vtanh.pop %v179
    %v202 = vtanh.pop %v184
    %v203 = vtanh.pop %v187
    %v204 = vtanh.pop %v192
    %v205 = vtanh.pop %v195
    %v206 = vld [vmem:[%s3] sm:$0xf]
    %v207 = vld [vmem:[%s3 + $0x4] sm:$0xf]
    %v208 = vld [vmem:[%s3 + $0x8] sm:$0xf]
    %v209 = vld [vmem:[%s3 + $0xc] sm:$0xf]
    %v210 = vld [vmem:[%s3 + $0x10] sm:$0xf]
    %v211 = vld [vmem:[%s3 + $0x14] sm:$0xf]
    %v212 = vld [vmem:[%s3 + $0x18] sm:$0xf]
    %v213 = vld [vmem:[%s3 + $0x1c] sm:$0xf]
    %v214 = vpack.c.bf16 %v199, %v198
    %v215 = vpack.c.bf16 %v201, %v200
    %v216 = vpack.c.bf16 %v203, %v202
    %v217 = vpack.c.bf16 %v205, %v204
    %v218 = vld [vmem:[%s4] sm:$0xff]
    %v219 = vld [vmem:[%s4 + $0x8] sm:$0xff]
    %v220 = vld [vmem:[%s4 + $0x10] sm:$0xff]
    %v221 = vld [vmem:[%s4 + $0x18] sm:$0xff]
    %v222 = vld [vmem:[%s4 + $0x20] sm:$0xff]
    %v223 = vld [vmem:[%s4 + $0x28] sm:$0xff]
    %v224 = vld [vmem:[%s4 + $0x30] sm:$0xff]
    %v225 = vld [vmem:[%s4 + $0x38] sm:$0xff]
    %227 = vset.pattern.permute.xlu0 0
    %228 = vperm.xlu0 %227, %v218
    %v229 = vpop.permute.xlu0 %228
    %232 = vset.pattern.permute.xlu0 0
    %233 = vperm.xlu0 %232, %v219
    %v234 = vpop.permute.xlu0 %233
    %237 = vset.pattern.permute.xlu0 0
    %238 = vperm.xlu0 %237, %v220
    %v239 = vpop.permute.xlu0 %238
    %242 = vset.pattern.permute.xlu0 0
    %243 = vperm.xlu0 %242, %v221
    %v244 = vpop.permute.xlu0 %243
    %247 = vset.pattern.permute.xlu0 0
    %248 = vperm.xlu0 %247, %v222
    %v249 = vpop.permute.xlu0 %248
    %252 = vset.pattern.permute.xlu0 0
    %253 = vperm.xlu0 %252, %v223
    %v254 = vpop.permute.xlu0 %253
    %257 = vset.pattern.permute.xlu0 0
    %258 = vperm.xlu0 %257, %v224
    %v259 = vpop.permute.xlu0 %258
    %262 = vset.pattern.permute.xlu0 0
    %263 = vperm.xlu0 %262, %v225
    %v264 = vpop.permute.xlu0 %263
    %v274 = vunpack.c.l.b16 %v206
    %v275 = vunpack.c.l.b16 %v207
    %v276 = vunpack.c.l.b16 %v208
    %v277 = vunpack.c.l.b16 %v209
    %v278 = vunpack.c.l.b16 %v210
    %v279 = vunpack.c.l.b16 %v211
    %v280 = vunpack.c.l.b16 %v212
    %v281 = vunpack.c.l.b16 %v213
    %v282 = vpack.c.b16 %v275, %v274
    %v283 = vpack.c.b16 %v277, %v276
    %v284 = vpack.c.b16 %v279, %v278
    %v285 = vpack.c.b16 %v281, %v280
    %vm286 = vcmask 523264
    %v288 = vsel %vm286, %v282, 0
    %v291 = vsel %vm286, %v283, 0
    %v294 = vsel %vm286, %v284, 0
    %v297 = vsel %vm286, %v285, 0
    %299 = vmatprep.subr.bf16.mxu0 0
    %300 = vmatpush1.bf16.msra.mxu0 %v214
    %301 = vmatprep.subr.bf16.mxu0 0
    %302 = vmatpush1.bf16.msra.mxu0 %v215
    %303 = vmatprep.subr.bf16.mxu0 0
    %304 = vmatpush1.bf16.msra.mxu0 %v216
    %305 = vmatprep.subr.bf16.mxu0 0
    %306 = vmatpush1.bf16.msra.mxu0 %v217
    %307 = vmatprep.subr.bf16.mxu0 0
    %308 = vmatpush1.bf16.msra.mxu0 0
    %309 = vmatprep.subr.bf16.mxu0 0
    %310 = vmatpush1.bf16.msra.mxu0 0
    %311 = vmatprep.subr.bf16.mxu0 0
    %312 = vmatpush1.bf16.msra.mxu0 0
    %313 = vmatprep.subr.bf16.mxu0 0
    %314 = vmatpush1.bf16.msra.mxu0 0
    %315 = vmatprep.subr.bf16.mxu0 0
    %316 = vmatpush1.bf16.msra.mxu0 0
    %317 = vmatprep.subr.bf16.mxu0 0
    %318 = vmatpush1.bf16.msra.mxu0 0
    %319 = vmatprep.subr.bf16.mxu0 0
    %320 = vmatpush1.bf16.msra.mxu0 0
    %321 = vmatprep.subr.bf16.mxu0 0
    %322 = vmatpush1.bf16.msra.mxu0 0
    %323 = vmatprep.subr.bf16.mxu0 0
    %324 = vmatpush1.bf16.msra.mxu0 0
    %325 = vmatprep.subr.bf16.mxu0 0
    %326 = vmatpush1.bf16.msra.mxu0 0
    %327 = vmatprep.subr.bf16.mxu0 0
    %328 = vmatpush1.bf16.msra.mxu0 0
    %329 = vmatprep.subr.bf16.mxu0 0
    %330 = vmatpush1.bf16.msra.mxu0 0
    %331 = vmatprep.mubr.bf16.mxu0 0
    %332 = vmatmul.mubr.bf16.gmra.mrb[0].mxu0 %v288
    %v333 = vpop.f32.mrb[0].mxu0
    %v334 = vadd.f32 %v229, %v333
    %v335 = vpop.f32.mrb[0].mxu0
    %v336 = vpop.f32.mrb[0].mxu0
    %v337 = vadd.f32 %v234, %v336
    %v338 = vpop.f32.mrb[0].mxu0
    %339 = vmatprep.mubr.bf16.mxu0 0
    %340 = vmatmul.mubr.bf16.gmra.mrb[0].mxu0 %v291
    %v341 = vpop.f32.mrb[0].mxu0
    %v342 = vadd.f32 %v239, %v341
    %v343 = vpop.f32.mrb[0].mxu0
    %v344 = vpop.f32.mrb[0].mxu0
    %v345 = vadd.f32 %v244, %v344
    %v346 = vpop.f32.mrb[0].mxu0
    %347 = vmatprep.mubr.bf16.mxu0 0
    %348 = vmatmul.mubr.bf16.gmra.mrb[0].mxu0 %v294
    %v349 = vpop.f32.mrb[0].mxu0
    %v350 = vadd.f32 %v249, %v349
    %v351 = vpop.f32.mrb[0].mxu0
    %v352 = vpop.f32.mrb[0].mxu0
    %v353 = vadd.f32 %v254, %v352
    %v354 = vpop.f32.mrb[0].mxu0
    %355 = vmatprep.mubr.bf16.mxu0 0
    %356 = vmatmul.mubr.bf16.gmra.mrb[0].mxu0 %v297
    %v357 = vpop.f32.mrb[0].mxu0
    %v358 = vadd.f32 %v259, %v357
    %v359 = vpop.f32.mrb[0].mxu0
    %v360 = vpop.f32.mrb[0].mxu0
    %v361 = vadd.f32 %v264, %v360
    %v362 = vpop.f32.mrb[0].mxu0
    %363 = vdwg.mxu0
    %v364 = vtanh.pop %v334
    %v365 = vtanh.pop %v337
    %v366 = vtanh.pop %v342
    %v367 = vtanh.pop %v345
    %v368 = vtanh.pop %v350
    %v369 = vtanh.pop %v353
    %v370 = vtanh.pop %v358
    %v371 = vtanh.pop %v361
    %v372 = vld [vmem:[%s5] sm:$0xf]
    %v373 = vld [vmem:[%s5 + $0x4] sm:$0xf]
    %v374 = vld [vmem:[%s5 + $0x8] sm:$0xf]
    %v375 = vld [vmem:[%s5 + $0xc] sm:$0xf]
    %v376 = vld [vmem:[%s5 + $0x10] sm:$0xf]
    %v377 = vld [vmem:[%s5 + $0x14] sm:$0xf]
    %v378 = vld [vmem:[%s5 + $0x18] sm:$0xf]
    %v379 = vld [vmem:[%s5 + $0x1c] sm:$0xf]
    %v380 = vpack.c.bf16 %v365, %v364
    %v381 = vpack.c.bf16 %v367, %v366
    %v382 = vpack.c.bf16 %v369, %v368
    %v383 = vpack.c.bf16 %v371, %v370
    %v384 = vld [vmem:[%s6] sm:$0xff]
    %v385 = vld [vmem:[%s6 + $0x8] sm:$0xff]
    %v386 = vld [vmem:[%s6 + $0x10] sm:$0xff]
    %v387 = vld [vmem:[%s6 + $0x18] sm:$0xff]
    %v388 = vld [vmem:[%s6 + $0x20] sm:$0xff]
    %v389 = vld [vmem:[%s6 + $0x28] sm:$0xff]
    %v390 = vld [vmem:[%s6 + $0x30] sm:$0xff]
    %v391 = vld [vmem:[%s6 + $0x38] sm:$0xff]
    %393 = vset.pattern.permute.xlu0 0
    %394 = vperm.xlu0 %393, %v384
    %v395 = vpop.permute.xlu0 %394
    %398 = vset.pattern.permute.xlu0 0
    %399 = vperm.xlu0 %398, %v385
    %v400 = vpop.permute.xlu0 %399
    %403 = vset.pattern.permute.xlu0 0
    %404 = vperm.xlu0 %403, %v386
    %v405 = vpop.permute.xlu0 %404
    %408 = vset.pattern.permute.xlu0 0
    %409 = vperm.xlu0 %408, %v387
    %v410 = vpop.permute.xlu0 %409
    %413 = vset.pattern.permute.xlu0 0
    %414 = vperm.xlu0 %413, %v388
    %v415 = vpop.permute.xlu0 %414
    %418 = vset.pattern.permute.xlu0 0
    %419 = vperm.xlu0 %418, %v389
    %v420 = vpop.permute.xlu0 %419
    %423 = vset.pattern.permute.xlu0 0
    %424 = vperm.xlu0 %423, %v390
    %v425 = vpop.permute.xlu0 %424
    %428 = vset.pattern.permute.xlu0 0
    %429 = vperm.xlu0 %428, %v391
    %v430 = vpop.permute.xlu0 %429
    %v440 = vunpack.c.l.b16 %v372
    %v441 = vunpack.c.l.b16 %v373
    %v442 = vunpack.c.l.b16 %v374
    %v443 = vunpack.c.l.b16 %v375
    %v444 = vunpack.c.l.b16 %v376
    %v445 = vunpack.c.l.b16 %v377
    %v446 = vunpack.c.l.b16 %v378
    %v447 = vunpack.c.l.b16 %v379
    %v448 = vpack.c.b16 %v441, %v440
    %v449 = vpack.c.b16 %v443, %v442
    %v450 = vpack.c.b16 %v445, %v444
    %v451 = vpack.c.b16 %v447, %v446
    %v453 = vsel %vm286, %v448, 0
    %v456 = vsel %vm286, %v449, 0
    %v459 = vsel %vm286, %v450, 0
    %v462 = vsel %vm286, %v451, 0
    %464 = vmatprep.subr.bf16.mxu0 0
    %465 = vmatpush1.bf16.msra.mxu0 %v380
    %466 = vmatprep.subr.bf16.mxu0 0
    %467 = vmatpush1.bf16.msra.mxu0 %v381
    %468 = vmatprep.subr.bf16.mxu0 0
    %469 = vmatpush1.bf16.msra.mxu0 %v382
    %470 = vmatprep.subr.bf16.mxu0 0
    %471 = vmatpush1.bf16.msra.mxu0 %v383
    %472 = vmatprep.subr.bf16.mxu0 0
    %473 = vmatpush1.bf16.msra.mxu0 0
    %474 = vmatprep.subr.bf16.mxu0 0
    %475 = vmatpush1.bf16.msra.mxu0 0
    %476 = vmatprep.subr.bf16.mxu0 0
    %477 = vmatpush1.bf16.msra.mxu0 0
    %478 = vmatprep.subr.bf16.mxu0 0
    %479 = vmatpush1.bf16.msra.mxu0 0
    %480 = vmatprep.subr.bf16.mxu0 0
    %481 = vmatpush1.bf16.msra.mxu0 0
    %482 = vmatprep.subr.bf16.mxu0 0
    %483 = vmatpush1.bf16.msra.mxu0 0
    %484 = vmatprep.subr.bf16.mxu0 0
    %485 = vmatpush1.bf16.msra.mxu0 0
    %486 = vmatprep.subr.bf16.mxu0 0
    %487 = vmatpush1.bf16.msra.mxu0 0
    %488 = vmatprep.subr.bf16.mxu0 0
    %489 = vmatpush1.bf16.msra.mxu0 0
    %490 = vmatprep.subr.bf16.mxu0 0
    %491 = vmatpush1.bf16.msra.mxu0 0
    %492 = vmatprep.subr.bf16.mxu0 0
    %493 = vmatpush1.bf16.msra.mxu0 0
    %494 = vmatprep.subr.bf16.mxu0 0
    %495 = vmatpush1.bf16.msra.mxu0 0
    %496 = vmatprep.mubr.bf16.mxu0 0
    %497 = vmatmul.mubr.bf16.gmra.mrb[0].mxu0 %v453
    %v498 = vpop.f32.mrb[0].mxu0
    %v499 = vadd.f32 %v395, %v498
    %v500 = vpop.f32.mrb[0].mxu0
    %v501 = vpop.f32.mrb[0].mxu0
    %v502 = vadd.f32 %v400, %v501
    %v503 = vpop.f32.mrb[0].mxu0
    %504 = vmatprep.mubr.bf16.mxu0 0
    %505 = vmatmul.mubr.bf16.gmra.mrb[0].mxu0 %v456
    %v506 = vpop.f32.mrb[0].mxu0
    %v507 = vadd.f32 %v405, %v506
    %v508 = vpop.f32.mrb[0].mxu0
    %v509 = vpop.f32.mrb[0].mxu0
    %v510 = vadd.f32 %v410, %v509
    %v511 = vpop.f32.mrb[0].mxu0
    %512 = vmatprep.mubr.bf16.mxu0 0
    %513 = vmatmul.mubr.bf16.gmra.mrb[0].mxu0 %v459
    %v514 = vpop.f32.mrb[0].mxu0
    %v515 = vadd.f32 %v415, %v514
    %v516 = vpop.f32.mrb[0].mxu0
    %v517 = vpop.f32.mrb[0].mxu0
    %v518 = vadd.f32 %v420, %v517
    %v519 = vpop.f32.mrb[0].mxu0
    %520 = vmatprep.mubr.bf16.mxu0 0
    %521 = vmatmul.mubr.bf16.gmra.mrb[0].mxu0 %v462
    %v522 = vpop.f32.mrb[0].mxu0
    %v523 = vadd.f32 %v425, %v522
    %v524 = vpop.f32.mrb[0].mxu0
    %v525 = vpop.f32.mrb[0].mxu0
    %v526 = vadd.f32 %v430, %v525
    %v527 = vpop.f32.mrb[0].mxu0
    %528 = vdwg.mxu0
    %v529 = vtanh.pop %v499
    %v530 = vtanh.pop %v502
    %v531 = vtanh.pop %v507
    %v532 = vtanh.pop %v510
    %v533 = vtanh.pop %v515
    %v534 = vtanh.pop %v518
    %v535 = vtanh.pop %v523
    %v536 = vtanh.pop %v526
    %v537 = vld [vmem:[%s7] sm:$0xff]
    %v538 = vld [vmem:[%s7 + $0x8] sm:$0xff]
    %v539 = vld [vmem:[%s7 + $0x10] sm:$0xff]
    %v540 = vld [vmem:[%s7 + $0x18] sm:$0xff]
    %v541 = vld [vmem:[%s7 + $0x20] sm:$0xff]
    %v542 = vld [vmem:[%s7 + $0x28] sm:$0xff]
    %v543 = vld [vmem:[%s7 + $0x30] sm:$0xff]
    %v544 = vld [vmem:[%s7 + $0x38] sm:$0xff]
    %546 = vset.pattern.permute.xlu0 0
    %547 = vperm.xlu0 %546, %v537
    %v548 = vpop.permute.xlu0 %547
    %551 = vset.pattern.permute.xlu0 0
    %552 = vperm.xlu0 %551, %v538
    %v553 = vpop.permute.xlu0 %552
    %556 = vset.pattern.permute.xlu0 0
    %557 = vperm.xlu0 %556, %v539
    %v558 = vpop.permute.xlu0 %557
    %561 = vset.pattern.permute.xlu0 0
    %562 = vperm.xlu0 %561, %v540
    %v563 = vpop.permute.xlu0 %562
    %566 = vset.pattern.permute.xlu0 0
    %567 = vperm.xlu0 %566, %v541
    %v568 = vpop.permute.xlu0 %567
    %571 = vset.pattern.permute.xlu0 0
    %572 = vperm.xlu0 %571, %v542
    %v573 = vpop.permute.xlu0 %572
    %576 = vset.pattern.permute.xlu0 0
    %577 = vperm.xlu0 %576, %v543
    %v578 = vpop.permute.xlu0 %577
    %581 = vset.pattern.permute.xlu0 0
    %582 = vperm.xlu0 %581, %v544
    %v583 = vpop.permute.xlu0 %582
    %v585 = vmul.f32 %v529, %v548
    %v586 = vmul.f32 %v530, %v553
    %v587 = vmul.f32 %v531, %v558
    %v588 = vmul.f32 %v532, %v563
    %v589 = vmul.f32 %v533, %v568
    %v590 = vmul.f32 %v534, %v573
    %v591 = vmul.f32 %v535, %v578
    %v592 = vmul.f32 %v536, %v583
    %vm593 = vcmask 64512
    %v594 = vsel %vm593, %v585, 0.0
    %v595 = vsel %vm593, %v586, 0.0
    %v596 = vadd.f32 %v594, %v595
    %v597 = vsel %vm593, %v587, 0.0
    %v598 = vadd.f32 %v596, %v597
    %v599 = vsel %vm593, %v588, 0.0
    %v600 = vadd.f32 %v598, %v599
    %v601 = vsel %vm593, %v589, 0.0
    %v602 = vadd.f32 %v600, %v601
    %v603 = vsel %vm593, %v590, 0.0
    %v604 = vadd.f32 %v602, %v603
    %v605 = vsel %vm593, %v591, 0.0
    %v606 = vadd.f32 %v604, %v605
    %v607 = vsel %vm593, %v592, 0.0
    %v608 = vadd.f32 %v606, %v607
    %v609 = vrot.slane %v608, 4
    %v610 = vadd.f32 %v608, %v609
    %v611 = vrot.slane %v610, 2
    %v612 = vadd.f32 %v610, %v611
    %v613 = vrot.slane %v612, 1
    %v614 = vadd.f32 %v612, %v613
    %v615 = vld [vmem:[#allocation2] sm:$0x1]
    %617 = vset.pattern.permute.xlu0 0
    %618 = vperm.xlu0 %617, %v615
    %v619 = vpop.permute.xlu0 %618
    %v621 = vlaneseq
    %v622 = vshrl.u32 %v621, 7
    %v623 = vsub.s32 0, %v622
    %v624 = vrot.slane %v619, %v623
    %v625 = vadd.f32 %v614, %v624
    %vm626 = vcmask 57344
    %627 = vst.msk [vmem:[#allocation3] sm:$0x1] %vm626, %v625
    // Predicated region
    $region38: #{tpu_custom_call.1} parent=1 // pred_check
      _
    $region39: #{tpu_custom_call.1} parent=1 // pred_check_branch
      %629 = sbr.rel (0) target = $region41
    $region40: #{tpu_custom_call.1} parent=1 // pred_region
      %s631 = ssub.s32 16, 16
      %632 = vsyncadd [#allocation4], %s631
      %s634 = sshll.u32 [#allocation3], 4
      %s635 = int_to_ptr.vmem [resolvable:$true] %s634
      %637 = dma.vmem_to_hbm [thread:$0]  %s635, 16, %s9, [#allocation4]
    $region41: #{tpu_custom_call.1} parent=1 // pred_fallthru
      _
    // Predicated region
    $region42: #{tpu_custom_call.1} parent=1 // pred_check
      _
    $region43: #{tpu_custom_call.1} parent=1 // pred_check_branch
      %639 = sbr.rel (0) target = $region45
    $region44: #{tpu_custom_call.1} parent=1 // pred_region
      %640 = dma.done [#allocation4], 16
    $region45: #{tpu_custom_call.1} parent=1 // pred_fallthru
      _
    %641 = vsyncpa [#allocation4], 1

</llo_original>
